<compile_context>
chip_gen: v7x
topology: tpu7x:2x2x1
jax: 0.10.0
libtpu: 0.0.40
codegen_flags: <defaults>
</compile_context>

<pallas_src>
import jax
import jax.numpy as jnp
from jax.experimental import pallas as pl
from jax.experimental.pallas import tpu as pltpu

_SUBLANE = 8    # logits padded to this many sublanes (rows)
_LANE = 256     # batch-tile granularity (multiple of the 128-lane width)


def mlp_kernel(x_ref, w1_ref, b1_ref, w2_ref, b2_ref, w3_ref, b3_ref, o_ref):
    # All operands are transposed: features on sublanes, batch on lanes.
    xT = x_ref[...]                                                   # (1, TB)

    # Linear(1, 32) + ReLU: K=1, so it is a pure-VPU broadcast multiply.
    h1 = jnp.maximum(w1_ref[...] * xT + b1_ref[...], 0.0)             # (32, TB)

    # nn.Dropout(): identity in eval/inference mode.
    # TODO(synk): training-mode dropout (p=0.5, 1/(1-p) rescale) would use
    # pltpu.prng_seed / pltpu.prng_random_bits masking.

    # Linear(32, 64) + ReLU (MXU, f32 accumulate), batch stays on lanes.
    h2 = jnp.dot(w2_ref[...], h1, preferred_element_type=jnp.float32) + b2_ref[...]
    h2 = jnp.maximum(h2, 0.0)                                         # (64, TB)

    # Linear(64, C) with C padded to 8 sublanes (extra rows are zero).
    out = jnp.dot(w3_ref[...], h2, preferred_element_type=jnp.float32) + b3_ref[...]
    o_ref[...] = out.astype(o_ref.dtype)                              # (C_pad, TB)


def net_forward(x, params, *, block_batch=8192):
    w1, b1, w2, b2, w3, b3 = params
    B, in_dim = x.shape
    assert in_dim == 1, "Net's first Linear expects a single input feature"
    num_classes = w3.shape[1]
    c_pad = max(_SUBLANE, pl.cdiv(num_classes, _SUBLANE) * _SUBLANE)

    # Transposed parameters (features on the sublane axis).
    w1t = w1.T                                                        # (32, 1)
    b1t = b1.reshape(-1, 1)                                           # (32, 1)
    w2t = w2.T                                                        # (64, 32)
    b2t = b2.reshape(-1, 1)                                           # (64, 1)
    w3t = jnp.zeros((c_pad, w3.shape[0]), w3.dtype).at[:num_classes, :].set(w3.T)
    b3t = jnp.zeros((c_pad, 1), b3.dtype).at[:num_classes, :].set(b3.reshape(-1, 1))

    # Batch tile: multiple of 256 lanes; prefer >=2 grid steps so the "parallel"
    # batch axis can be sharded over both v7x TensorCores.
    b_ceil = pl.cdiv(B, _LANE) * _LANE
    tb = max(_LANE, (min(block_batch, b_ceil) // _LANE) * _LANE)
    if b_ceil // tb < 2 and b_ceil >= 2 * _LANE:
        tb = max(_LANE, pl.cdiv(b_ceil // 2, _LANE) * _LANE)
    b_pad = pl.cdiv(B, tb) * tb

    xT = x.T                                                          # (1, B), lane-dense
    if b_pad != B:
        xT = jnp.pad(xT, ((0, 0), (0, b_pad - B)))

    grid = (b_pad // tb,)

    def resident(shape):
        # Constant block index -> fetched once, stays VMEM-resident across the grid.
        return pl.BlockSpec(shape, lambda i: (0, 0))

    # Cost model for the actual layout: two small-M MXU matmuls + the VPU layer 1.
    flops = 2 * b_pad * (32 * 64 + 64 * c_pad) + 2 * b_pad * 32
    weight_bytes = sum(
        int(p.size) * p.dtype.itemsize for p in (w1t, b1t, w2t, b2t, w3t, b3t)
    )
    bytes_accessed = int(xT.size) * 4 + b_pad * c_pad * 4 + weight_bytes

    out = pl.pallas_call(
        mlp_kernel,
        out_shape=jax.ShapeDtypeStruct((c_pad, b_pad), jnp.float32),
        grid=grid,
        in_specs=[
            pl.BlockSpec((1, tb), lambda i: (0, i)),    # x: batch-tiled, pipelined
            resident(w1t.shape), resident(b1t.shape),
            resident(w2t.shape), resident(b2t.shape),
            resident(w3t.shape), resident(b3t.shape),
        ],
        out_specs=pl.BlockSpec((c_pad, tb), lambda i: (0, i)),
        compiler_params=pltpu.CompilerParams(
            dimension_semantics=("parallel",),          # megacore sharding on v7x
            vmem_limit_bytes=32 * 1024 * 1024,          # explicit; footprint is ~1-2 MiB
        ),
        cost_estimate=pl.CostEstimate(
            flops=int(flops), transcendentals=0, bytes_accessed=int(bytes_accessed)
        ),
    )(xT, w1t, b1t, w2t, b2t, w3t, b3t)

    # De-pad classes/batch and hand back the conventional (B, C) layout.
    return out[:num_classes, :B].T


def init_params(key, num_classes=2):
    """Deterministic init mimicking PyTorch's nn.Linear default (uniform +/- 1/sqrt(fan_in))."""
    dims = [(1, 32), (32, 64), (64, num_classes)]
    params = []
    for fan_in, fan_out in dims:
        key, kw, kb = jax.random.split(key, 3)
        bound = 1.0 / jnp.sqrt(jnp.float32(fan_in))
        w = jax.random.uniform(kw, (fan_in, fan_out), jnp.float32, -bound, bound)
        b = jax.random.uniform(kb, (1, fan_out), jnp.float32, -bound, bound)
        params += [w, b]
    return tuple(params)


if __name__ == "__main__":
    key = jax.random.PRNGKey(0)
    key, kx = jax.random.split(key)
    batch = 8
    x = jax.random.normal(kx, (batch, 1), jnp.float32)

    params = init_params(key, num_classes=2)

    out = net_forward(x, params)
    out = jax.block_until_ready(out)

    # Pure-JAX reference check (eval-mode semantics: dropout = identity).
    w1, b1, w2, b2, w3, b3 = params
    ref = jnp.maximum(x @ w1 + b1, 0.0)
    ref = jnp.maximum(ref @ w2 + b2, 0.0)
    ref = ref @ w3 + b3
    assert out.shape == (batch, 2), out.shape
    assert jnp.allclose(out, ref, atol=1e-5, rtol=1e-5)

    print("KERNEL_OK")
</pallas_src>

<mosaic_0001>
module attributes {stable_mosaic.version = 11 : i64} {
  func.func @mlp_kernel(%arg0: i32, %arg1: memref<1x256xf32, #tpu.memory_space<vmem>>, %arg2: memref<32x1xf32, #tpu.memory_space<vmem>>, %arg3: memref<32x1xf32, #tpu.memory_space<vmem>>, %arg4: memref<64x32xf32, #tpu.memory_space<vmem>>, %arg5: memref<64x1xf32, #tpu.memory_space<vmem>>, %arg6: memref<8x64xf32, #tpu.memory_space<vmem>>, %arg7: memref<8x1xf32, #tpu.memory_space<vmem>>, %arg8: memref<8x256xf32, #tpu.memory_space<vmem>>) attributes {dimension_semantics = [#tpu.dimension_semantics<parallel>], iteration_bounds = array<i64: 1>, scalar_prefetch = 0 : i64, scratch_operands = 0 : i64, tpu.core_type = #tpu.core_type<tc>, window_params = [{transform_indices = @transform_0, window_bounds = array<i64: 1, 256>}, {pipeline_mode = #tpu.pipeline_mode<synchronous>, transform_indices = @transform_1, window_bounds = array<i64: 32, 1>}, {pipeline_mode = #tpu.pipeline_mode<synchronous>, transform_indices = @transform_2, window_bounds = array<i64: 32, 1>}, {pipeline_mode = #tpu.pipeline_mode<synchronous>, transform_indices = @transform_3, window_bounds = array<i64: 64, 32>}, {pipeline_mode = #tpu.pipeline_mode<synchronous>, transform_indices = @transform_4, window_bounds = array<i64: 64, 1>}, {pipeline_mode = #tpu.pipeline_mode<synchronous>, transform_indices = @transform_5, window_bounds = array<i64: 8, 64>}, {pipeline_mode = #tpu.pipeline_mode<synchronous>, transform_indices = @transform_6, window_bounds = array<i64: 8, 1>}, {transform_indices = @transform_7, window_bounds = array<i64: 8, 256>}]} {
    %c0 = arith.constant 0 : index
    %c0_0 = arith.constant 0 : index
    %0 = vector.load %arg1[%c0, %c0_0] : memref<1x256xf32, #tpu.memory_space<vmem>>, vector<1x256xf32>
    %c0_1 = arith.constant 0 : index
    %c0_2 = arith.constant 0 : index
    %1 = vector.load %arg2[%c0_1, %c0_2] : memref<32x1xf32, #tpu.memory_space<vmem>>, vector<32x1xf32>
    %2 = vector.broadcast %1 : vector<32x1xf32> to vector<32x256xf32>
    %3 = vector.broadcast %0 : vector<1x256xf32> to vector<32x256xf32>
    %4 = arith.mulf %2, %3 : vector<32x256xf32>
    %c0_3 = arith.constant 0 : index
    %c0_4 = arith.constant 0 : index
    %5 = vector.load %arg3[%c0_3, %c0_4] : memref<32x1xf32, #tpu.memory_space<vmem>>, vector<32x1xf32>
    %6 = vector.broadcast %5 : vector<32x1xf32> to vector<32x256xf32>
    %7 = arith.addf %4, %6 : vector<32x256xf32>
    %cst = arith.constant 0.000000e+00 : f32
    %8 = vector.broadcast %cst : f32 to vector<32x256xf32>
    %9 = arith.maximumf %7, %8 : vector<32x256xf32>
    %c0_5 = arith.constant 0 : index
    %c0_6 = arith.constant 0 : index
    %10 = vector.load %arg4[%c0_5, %c0_6] : memref<64x32xf32, #tpu.memory_space<vmem>>, vector<64x32xf32>
    %cst_7 = arith.constant dense<0.000000e+00> : vector<64x256xf32>
    %11 = tpu.matmul %10, %9, %cst_7 {dimension_numbers = #tpu.dot_dimension_numbers<[1], [0], [0], [1], [0, 0, 1, 1], [], []>} : vector<64x32xf32>, vector<32x256xf32>, vector<64x256xf32> -> vector<64x256xf32>
    %c0_8 = arith.constant 0 : index
    %c0_9 = arith.constant 0 : index
    %12 = vector.load %arg5[%c0_8, %c0_9] : memref<64x1xf32, #tpu.memory_space<vmem>>, vector<64x1xf32>
    %13 = vector.broadcast %12 : vector<64x1xf32> to vector<64x256xf32>
    %14 = arith.addf %11, %13 : vector<64x256xf32>
    %cst_10 = arith.constant 0.000000e+00 : f32
    %15 = vector.broadcast %cst_10 : f32 to vector<64x256xf32>
    %16 = arith.maximumf %14, %15 : vector<64x256xf32>
    %c0_11 = arith.constant 0 : index
    %c0_12 = arith.constant 0 : index
    %17 = vector.load %arg6[%c0_11, %c0_12] : memref<8x64xf32, #tpu.memory_space<vmem>>, vector<8x64xf32>
    %cst_13 = arith.constant dense<0.000000e+00> : vector<8x256xf32>
    %18 = tpu.matmul %17, %16, %cst_13 {dimension_numbers = #tpu.dot_dimension_numbers<[1], [0], [0], [1], [0, 0, 1, 1], [], []>} : vector<8x64xf32>, vector<64x256xf32>, vector<8x256xf32> -> vector<8x256xf32>
    %c0_14 = arith.constant 0 : index
    %c0_15 = arith.constant 0 : index
    %19 = vector.load %arg7[%c0_14, %c0_15] : memref<8x1xf32, #tpu.memory_space<vmem>>, vector<8x1xf32>
    %20 = vector.broadcast %19 : vector<8x1xf32> to vector<8x256xf32>
    %21 = arith.addf %18, %20 : vector<8x256xf32>
    %c0_16 = arith.constant 0 : index
    %c0_17 = arith.constant 0 : index
    %22 = vector.load %arg8[%c0_16, %c0_17] : memref<8x256xf32, #tpu.memory_space<vmem>>, vector<8x256xf32>
    tpu.vector_store %arg8[%c0_16, %c0_17], %21 {strides = array<i32>} : memref<8x256xf32, #tpu.memory_space<vmem>>, vector<8x256xf32>,
    return
  }
  func.func @transform_0(%arg0: i32) -> (i32, i32) {
    %c0_i32 = arith.constant 0 : i32
    %c0_i32_0 = arith.constant 0 : i32
    return %c0_i32, %arg0 : i32, i32
  }
  func.func @transform_1(%arg0: i32) -> (i32, i32) {
    %c0_i32 = arith.constant 0 : i32
    %c0_i32_0 = arith.constant 0 : i32
    %c0_i32_1 = arith.constant 0 : i32
    return %c0_i32, %c0_i32_0 : i32, i32
  }
  func.func @transform_2(%arg0: i32) -> (i32, i32) {
    %c0_i32 = arith.constant 0 : i32
    %c0_i32_0 = arith.constant 0 : i32
    %c0_i32_1 = arith.constant 0 : i32
    return %c0_i32, %c0_i32_0 : i32, i32
  }
  func.func @transform_3(%arg0: i32) -> (i32, i32) {
    %c0_i32 = arith.constant 0 : i32
    %c0_i32_0 = arith.constant 0 : i32
    %c0_i32_1 = arith.constant 0 : i32
    return %c0_i32, %c0_i32_0 : i32, i32
  }
  func.func @transform_4(%arg0: i32) -> (i32, i32) {
    %c0_i32 = arith.constant 0 : i32
    %c0_i32_0 = arith.constant 0 : i32
    %c0_i32_1 = arith.constant 0 : i32
    return %c0_i32, %c0_i32_0 : i32, i32
  }
  func.func @transform_5(%arg0: i32) -> (i32, i32) {
    %c0_i32 = arith.constant 0 : i32
    %c0_i32_0 = arith.constant 0 : i32
    %c0_i32_1 = arith.constant 0 : i32
    return %c0_i32, %c0_i32_0 : i32, i32
  }
  func.func @transform_6(%arg0: i32) -> (i32, i32) {
    %c0_i32 = arith.constant 0 : i32
    %c0_i32_0 = arith.constant 0 : i32
    %c0_i32_1 = arith.constant 0 : i32
    return %c0_i32, %c0_i32_0 : i32, i32
  }
  func.func @transform_7(%arg0: i32) -> (i32, i32) {
    %c0_i32 = arith.constant 0 : i32
    %c0_i32_0 = arith.constant 0 : i32
    return %c0_i32, %arg0 : i32, i32
  }
}

</mosaic_0001>

<llo_original>
// kernel: tpu_custom_call.1
$region0: #{tpu_custom_call.1}
  #allocation0 [shape = 'u32[]', space=smem, size = 0x4, offset = 0x4, fixed_abs, tag = 'smem constant byte address 0x4 - core index']
  #allocation1 [shape = 'u32[144,128]{1,0:T(1,128)}', space=vmem, size = 0x12000, scoped, tag = 'internal scratch']
  %s0 = inlined_call_operand.vmem [shape: f32[1,256], index: 0, kind: input, shape index: {}]
  %s1 = inlined_call_operand.vmem [shape: f32[32,1], index: 1, kind: input, shape index: {}]
  %s2 = inlined_call_operand.vmem [shape: f32[32,1], index: 2, kind: input, shape index: {}]
  %s3 = inlined_call_operand.vmem [shape: f32[64,32], index: 3, kind: input, shape index: {}]
  %s4 = inlined_call_operand.vmem [shape: f32[64,1], index: 4, kind: input, shape index: {}]
  %s5 = inlined_call_operand.vmem [shape: f32[8,64], index: 5, kind: input, shape index: {}]
  %s6 = inlined_call_operand.vmem [shape: f32[8,1], index: 6, kind: input, shape index: {}]
  %s7 = inlined_call_operand.hbm [shape: f32[8,256], index: 7, kind: output, shape index: {}]
  %s8 = sld [smem:[#allocation0]]
  $region38: #{tpu_custom_call.1} parent=0
    _
  %s10 = ssub.s32 1, %s8
  %s11 = scalar_select 0, %s10, %s8
  $region1: #{tpu_custom_call.1} parent=0
    #allocation2 [shape = 'u8[8192]{0}', space=vmem, size = 0x2000, scoped, tag = 'output window, operand 0, single buffered']
    #allocation3 [shape = 's32[1]{0}', space=sflag, size = 0x4, scoped, tag = 'scoped memory for tpu_custom_call.1']
    %12 = vsyncpa [#allocation3], 0
    // Predicated region
    $region2: #{tpu_custom_call.1} parent=1 // pred_check
      _
    $region3: #{tpu_custom_call.1} parent=1 // pred_check_branch
      %14 = sbr.rel (0) target = $region5
    $region4: #{tpu_custom_call.1} parent=1 // pred_region
      _
    $region5: #{tpu_custom_call.1} parent=1 // pred_fallthru
      _
    // Predicated region
    $region6: #{tpu_custom_call.1} parent=1 // pred_check
      _
    $region7: #{tpu_custom_call.1} parent=1 // pred_check_branch
      %16 = sbr.rel (0) target = $region9
    $region8: #{tpu_custom_call.1} parent=1 // pred_region
      _
    $region9: #{tpu_custom_call.1} parent=1 // pred_fallthru
      _
    // Predicated region
    $region10: #{tpu_custom_call.1} parent=1 // pred_check
      _
    $region11: #{tpu_custom_call.1} parent=1 // pred_check_branch
      %18 = sbr.rel (0) target = $region13
    $region12: #{tpu_custom_call.1} parent=1 // pred_region
      _
    $region13: #{tpu_custom_call.1} parent=1 // pred_fallthru
      _
    // Predicated region
    $region14: #{tpu_custom_call.1} parent=1 // pred_check
      _
    $region15: #{tpu_custom_call.1} parent=1 // pred_check_branch
      %20 = sbr.rel (0) target = $region17
    $region16: #{tpu_custom_call.1} parent=1 // pred_region
      _
    $region17: #{tpu_custom_call.1} parent=1 // pred_fallthru
      _
    // Predicated region
    $region18: #{tpu_custom_call.1} parent=1 // pred_check
      _
    $region19: #{tpu_custom_call.1} parent=1 // pred_check_branch
      %22 = sbr.rel (0) target = $region21
    $region20: #{tpu_custom_call.1} parent=1 // pred_region
      _
    $region21: #{tpu_custom_call.1} parent=1 // pred_fallthru
      _
    // Predicated region
    $region22: #{tpu_custom_call.1} parent=1 // pred_check
      _
    $region23: #{tpu_custom_call.1} parent=1 // pred_check_branch
      %24 = sbr.rel (0) target = $region25
    $region24: #{tpu_custom_call.1} parent=1 // pred_region
      _
    $region25: #{tpu_custom_call.1} parent=1 // pred_fallthru
      _
    // Predicated region
    $region26: #{tpu_custom_call.1} parent=1 // pred_check
      _
    $region27: #{tpu_custom_call.1} parent=1 // pred_check_branch
      %26 = sbr.rel (0) target = $region29
    $region28: #{tpu_custom_call.1} parent=1 // pred_region
      _
    $region29: #{tpu_custom_call.1} parent=1 // pred_fallthru
      _
    %v27 = vld [vmem:[%s0] sm:$0x3]
    %v28 = vld [vmem:[%s1] sm:$0xff]
    %v29 = vld [vmem:[%s1 + $0x8] sm:$0xff]
    %v30 = vld [vmem:[%s1 + $0x10] sm:$0xff]
    %v31 = vld [vmem:[%s1 + $0x18] sm:$0xff]
    %33 = vset.pattern.permute.xlu0 0
    %34 = vperm.xlu0 %33, %v28
    %v35 = vpop.permute.xlu0 %34
    %38 = vset.pattern.permute.xlu0 0
    %39 = vperm.xlu0 %38, %v29
    %v40 = vpop.permute.xlu0 %39
    %43 = vset.pattern.permute.xlu0 0
    %44 = vperm.xlu0 %43, %v30
    %v45 = vpop.permute.xlu0 %44
    %48 = vset.pattern.permute.xlu0 0
    %49 = vperm.xlu0 %48, %v31
    %v50 = vpop.permute.xlu0 %49
    %v53 = vlaneseq
    %v54 = vshrl.u32 %v53, 7
    %v55 = vsub.s32 0, %v54
    %v56 = vrot.slane %v27, %v55
    %v57 = vlaneseq
    %v58 = vshrl.u32 %v57, 7
    %v59 = vsub.s32 1, %v58
    %v60 = vrot.slane %v27, %v59
    %v63 = vmul.f32 %v35, %v56
    %v64 = vmul.f32 %v35, %v60
    %v65 = vmul.f32 %v40, %v56
    %v66 = vmul.f32 %v40, %v60
    %v67 = vmul.f32 %v45, %v56
    %v68 = vmul.f32 %v45, %v60
    %v69 = vmul.f32 %v50, %v56
    %v70 = vmul.f32 %v50, %v60
    %v71 = vld [vmem:[%s2] sm:$0xff]
    %v72 = vld [vmem:[%s2 + $0x8] sm:$0xff]
    %v73 = vld [vmem:[%s2 + $0x10] sm:$0xff]
    %v74 = vld [vmem:[%s2 + $0x18] sm:$0xff]
    %76 = vset.pattern.permute.xlu0 0
    %77 = vperm.xlu0 %76, %v71
    %v78 = vpop.permute.xlu0 %77
    %81 = vset.pattern.permute.xlu0 0
    %82 = vperm.xlu0 %81, %v72
    %v83 = vpop.permute.xlu0 %82
    %86 = vset.pattern.permute.xlu0 0
    %87 = vperm.xlu0 %86, %v73
    %v88 = vpop.permute.xlu0 %87
    %91 = vset.pattern.permute.xlu0 0
    %92 = vperm.xlu0 %91, %v74
    %v93 = vpop.permute.xlu0 %92
    %v95 = vadd.f32 %v63, %v78
    %v96 = vadd.f32 %v64, %v78
    %v97 = vadd.f32 %v65, %v83
    %v98 = vadd.f32 %v66, %v83
    %v99 = vadd.f32 %v67, %v88
    %v100 = vadd.f32 %v68, %v88
    %v101 = vadd.f32 %v69, %v93
    %v102 = vadd.f32 %v70, %v93
    %v103 = vmax.f32 %v95, 0.0
    %v104 = vmax.f32 %v96, 0.0
    %v105 = vmax.f32 %v97, 0.0
    %v106 = vmax.f32 %v98, 0.0
    %v107 = vmax.f32 %v99, 0.0
    %v108 = vmax.f32 %v100, 0.0
    %v109 = vmax.f32 %v101, 0.0
    %v110 = vmax.f32 %v102, 0.0
    %v111 = vld [vmem:[%s3] sm:$0xff]
    %v112 = vld [vmem:[%s3 + $0x8] sm:$0xff]
    %v113 = vld [vmem:[%s3 + $0x10] sm:$0xff]
    %v114 = vld [vmem:[%s3 + $0x18] sm:$0xff]
    %v115 = vld [vmem:[%s3 + $0x20] sm:$0xff]
    %v116 = vld [vmem:[%s3 + $0x28] sm:$0xff]
    %v117 = vld [vmem:[%s3 + $0x30] sm:$0xff]
    %v118 = vld [vmem:[%s3 + $0x38] sm:$0xff]
    %v119 = vld [vmem:[%s4] sm:$0xff]
    %v120 = vld [vmem:[%s4 + $0x8] sm:$0xff]
    %v121 = vld [vmem:[%s4 + $0x10] sm:$0xff]
    %v122 = vld [vmem:[%s4 + $0x18] sm:$0xff]
    %v123 = vld [vmem:[%s4 + $0x20] sm:$0xff]
    %v124 = vld [vmem:[%s4 + $0x28] sm:$0xff]
    %v125 = vld [vmem:[%s4 + $0x30] sm:$0xff]
    %v126 = vld [vmem:[%s4 + $0x38] sm:$0xff]
    %128 = vset.pattern.permute.xlu0 0
    %129 = vperm.xlu0 %128, %v119
    %v130 = vpop.permute.xlu0 %129
    %133 = vset.pattern.permute.xlu0 0
    %134 = vperm.xlu0 %133, %v120
    %v135 = vpop.permute.xlu0 %134
    %138 = vset.pattern.permute.xlu0 0
    %139 = vperm.xlu0 %138, %v121
    %v140 = vpop.permute.xlu0 %139
    %143 = vset.pattern.permute.xlu0 0
    %144 = vperm.xlu0 %143, %v122
    %v145 = vpop.permute.xlu0 %144
    %148 = vset.pattern.permute.xlu0 0
    %149 = vperm.xlu0 %148, %v123
    %v150 = vpop.permute.xlu0 %149
    %153 = vset.pattern.permute.xlu0 0
    %154 = vperm.xlu0 %153, %v124
    %v155 = vpop.permute.xlu0 %154
    %158 = vset.pattern.permute.xlu0 0
    %159 = vperm.xlu0 %158, %v125
    %v160 = vpop.permute.xlu0 %159
    %163 = vset.pattern.permute.xlu0 0
    %164 = vperm.xlu0 %163, %v126
    %v165 = vpop.permute.xlu0 %164
    %vm167 = vcmask 261120
    %v169 = vsel %vm167, %v111, 0
    %v172 = vsel %vm167, %v112, 0
    %v175 = vsel %vm167, %v113, 0
    %v178 = vsel %vm167, %v114, 0
    %v181 = vsel %vm167, %v115, 0
    %v184 = vsel %vm167, %v116, 0
    %v187 = vsel %vm167, %v117, 0
    %v190 = vsel %vm167, %v118, 0
    %192 = vmatprep.subr.mxu0 %v104
    %193 = vmatpush1.msra.mxu0 %v103
    %194 = vmatprep.subr.mxu0 %v106
    %195 = vmatpush1.msra.mxu0 %v105
    %196 = vmatprep.subr.mxu0 %v108
    %197 = vmatpush1.msra.mxu0 %v107
    %198 = vmatprep.subr.mxu0 %v110
    %199 = vmatpush1.msra.mxu0 %v109
    %200 = vmatprep.subr.mxu0 0.0
    %201 = vmatpush1.msra.mxu0 0.0
    %202 = vmatprep.subr.mxu0 0.0
    %203 = vmatpush1.msra.mxu0 0.0
    %204 = vmatprep.subr.mxu0 0.0
    %205 = vmatpush1.msra.mxu0 0.0
    %206 = vmatprep.subr.mxu0 0.0
    %207 = vmatpush1.msra.mxu0 0.0
    %208 = vmatprep.subr.mxu0 0.0
    %209 = vmatpush1.msra.mxu0 0.0
    %210 = vmatprep.subr.mxu0 0.0
    %211 = vmatpush1.msra.mxu0 0.0
    %212 = vmatprep.subr.mxu0 0.0
    %213 = vmatpush1.msra.mxu0 0.0
    %214 = vmatprep.subr.mxu0 0.0
    %215 = vmatpush1.msra.mxu0 0.0
    %216 = vmatprep.subr.mxu0 0.0
    %217 = vmatpush1.msra.mxu0 0.0
    %218 = vmatprep.subr.mxu0 0.0
    %219 = vmatpush1.msra.mxu0 0.0
    %220 = vmatprep.subr.mxu0 0.0
    %221 = vmatpush1.msra.mxu0 0.0
    %222 = vmatprep.subr.mxu0 0.0
    %223 = vmatpush1.msra.mxu0 0.0
    %224 = vmatprep.subr.mxu0 0.0
    %225 = vmatpush1.msra.mxu0 0.0
    %226 = vmatprep.subr.mxu0 0.0
    %227 = vmatpush1.msra.mxu0 0.0
    %228 = vmatprep.subr.mxu0 0.0
    %229 = vmatpush1.msra.mxu0 0.0
    %230 = vmatprep.subr.mxu0 0.0
    %231 = vmatpush1.msra.mxu0 0.0
    %232 = vmatprep.subr.mxu0 0.0
    %233 = vmatpush1.msra.mxu0 0.0
    %234 = vmatprep.subr.mxu0 0.0
    %235 = vmatpush1.msra.mxu0 0.0
    %236 = vmatprep.subr.mxu0 0.0
    %237 = vmatpush1.msra.mxu0 0.0
    %238 = vmatprep.subr.mxu0 0.0
    %239 = vmatpush1.msra.mxu0 0.0
    %240 = vmatprep.subr.mxu0 0.0
    %241 = vmatpush1.msra.mxu0 0.0
    %242 = vmatprep.subr.mxu0 0.0
    %243 = vmatpush1.msra.mxu0 0.0
    %244 = vmatprep.subr.mxu0 0.0
    %245 = vmatpush1.msra.mxu0 0.0
    %246 = vmatprep.subr.mxu0 0.0
    %247 = vmatpush1.msra.mxu0 0.0
    %248 = vmatprep.subr.mxu0 0.0
    %249 = vmatpush1.msra.mxu0 0.0
    %250 = vmatprep.subr.mxu0 0.0
    %251 = vmatpush1.msra.mxu0 0.0
    %252 = vmatprep.subr.mxu0 0.0
    %253 = vmatpush1.msra.mxu0 0.0
    %254 = vmatprep.subr.mxu0 0.0
    %255 = vmatpush1.msra.mxu0 0.0
    %256 = vmatprep.mubr.f32.mxu0 0.0
    %257 = vmatmul.mubr.f32.gmra.mrb[0].mxu0 %v169
    %v258 = vpop.f32.mrb[0].mxu0
    %v259 = vadd.f32 %v130, %v258
    %v260 = vpop.f32.mrb[0].mxu0
    %v261 = vadd.f32 %v130, %v260
    %262 = vmatprep.mubr.f32.mxu0 0.0
    %263 = vmatmul.mubr.f32.gmra.mrb[0].mxu0 %v172
    %v264 = vpop.f32.mrb[0].mxu0
    %v265 = vadd.f32 %v135, %v264
    %v266 = vpop.f32.mrb[0].mxu0
    %v267 = vadd.f32 %v135, %v266
    %268 = vmatprep.mubr.f32.mxu0 0.0
    %269 = vmatmul.mubr.f32.gmra.mrb[0].mxu0 %v175
    %v270 = vpop.f32.mrb[0].mxu0
    %v271 = vadd.f32 %v140, %v270
    %v272 = vpop.f32.mrb[0].mxu0
    %v273 = vadd.f32 %v140, %v272
    %274 = vmatprep.mubr.f32.mxu0 0.0
    %275 = vmatmul.mubr.f32.gmra.mrb[0].mxu0 %v178
    %v276 = vpop.f32.mrb[0].mxu0
    %v277 = vadd.f32 %v145, %v276
    %v278 = vpop.f32.mrb[0].mxu0
    %v279 = vadd.f32 %v145, %v278
    %280 = vmatprep.mubr.f32.mxu0 0.0
    %281 = vmatmul.mubr.f32.gmra.mrb[0].mxu0 %v181
    %v282 = vpop.f32.mrb[0].mxu0
    %v283 = vadd.f32 %v150, %v282
    %v284 = vpop.f32.mrb[0].mxu0
    %v285 = vadd.f32 %v150, %v284
    %286 = vmatprep.mubr.f32.mxu0 0.0
    %287 = vmatmul.mubr.f32.gmra.mrb[0].mxu0 %v184
    %v288 = vpop.f32.mrb[0].mxu0
    %v289 = vadd.f32 %v155, %v288
    %v290 = vpop.f32.mrb[0].mxu0
    %v291 = vadd.f32 %v155, %v290
    %292 = vmatprep.mubr.f32.mxu0 0.0
    %293 = vmatmul.mubr.f32.gmra.mrb[0].mxu0 %v187
    %v294 = vpop.f32.mrb[0].mxu0
    %v295 = vadd.f32 %v160, %v294
    %v296 = vpop.f32.mrb[0].mxu0
    %v297 = vadd.f32 %v160, %v296
    %298 = vmatprep.mubr.f32.mxu0 0.0
    %299 = vmatmul.mubr.f32.gmra.mrb[0].mxu0 %v190
    %v300 = vpop.f32.mrb[0].mxu0
    %v301 = vadd.f32 %v165, %v300
    %v302 = vpop.f32.mrb[0].mxu0
    %v303 = vadd.f32 %v165, %v302
    %304 = vdwg.mxu0
    %v305 = vmax.f32 %v259, 0.0
    %v306 = vmax.f32 %v261, 0.0
    %v307 = vmax.f32 %v265, 0.0
    %v308 = vmax.f32 %v267, 0.0
    %v309 = vmax.f32 %v271, 0.0
    %v310 = vmax.f32 %v273, 0.0
    %v311 = vmax.f32 %v277, 0.0
    %v312 = vmax.f32 %v279, 0.0
    %v313 = vmax.f32 %v283, 0.0
    %v314 = vmax.f32 %v285, 0.0
    %v315 = vmax.f32 %v289, 0.0
    %v316 = vmax.f32 %v291, 0.0
    %v317 = vmax.f32 %v295, 0.0
    %v318 = vmax.f32 %v297, 0.0
    %v319 = vmax.f32 %v301, 0.0
    %v320 = vmax.f32 %v303, 0.0
    %v321 = vld [vmem:[%s5] sm:$0xff]
    %v322 = vld [vmem:[%s6] sm:$0xff]
    %324 = vset.pattern.permute.xlu0 0
    %325 = vperm.xlu0 %324, %v322
    %v326 = vpop.permute.xlu0 %325
    %vm328 = vcmask 523264
    %v330 = vsel %vm328, %v321, 0
    %332 = vmatprep.subr.mxu0 %v306
    %333 = vmatpush1.msra.mxu0 %v305
    %334 = vmatprep.subr.mxu0 %v308
    %335 = vmatpush1.msra.mxu0 %v307
    %336 = vmatprep.subr.mxu0 %v310
    %337 = vmatpush1.msra.mxu0 %v309
    %338 = vmatprep.subr.mxu0 %v312
    %339 = vmatpush1.msra.mxu0 %v311
    %340 = vmatprep.subr.mxu0 %v314
    %341 = vmatpush1.msra.mxu0 %v313
    %342 = vmatprep.subr.mxu0 %v316
    %343 = vmatpush1.msra.mxu0 %v315
    %344 = vmatprep.subr.mxu0 %v318
    %345 = vmatpush1.msra.mxu0 %v317
    %346 = vmatprep.subr.mxu0 %v320
    %347 = vmatpush1.msra.mxu0 %v319
    %348 = vmatprep.subr.mxu0 0.0
    %349 = vmatpush1.msra.mxu0 0.0
    %350 = vmatprep.subr.mxu0 0.0
    %351 = vmatpush1.msra.mxu0 0.0
    %352 = vmatprep.subr.mxu0 0.0
    %353 = vmatpush1.msra.mxu0 0.0
    %354 = vmatprep.subr.mxu0 0.0
    %355 = vmatpush1.msra.mxu0 0.0
    %356 = vmatprep.subr.mxu0 0.0
    %357 = vmatpush1.msra.mxu0 0.0
    %358 = vmatprep.subr.mxu0 0.0
    %359 = vmatpush1.msra.mxu0 0.0
    %360 = vmatprep.subr.mxu0 0.0
    %361 = vmatpush1.msra.mxu0 0.0
    %362 = vmatprep.subr.mxu0 0.0
    %363 = vmatpush1.msra.mxu0 0.0
    %364 = vmatprep.subr.mxu0 0.0
    %365 = vmatpush1.msra.mxu0 0.0
    %366 = vmatprep.subr.mxu0 0.0
    %367 = vmatpush1.msra.mxu0 0.0
    %368 = vmatprep.subr.mxu0 0.0
    %369 = vmatpush1.msra.mxu0 0.0
    %370 = vmatprep.subr.mxu0 0.0
    %371 = vmatpush1.msra.mxu0 0.0
    %372 = vmatprep.subr.mxu0 0.0
    %373 = vmatpush1.msra.mxu0 0.0
    %374 = vmatprep.subr.mxu0 0.0
    %375 = vmatpush1.msra.mxu0 0.0
    %376 = vmatprep.subr.mxu0 0.0
    %377 = vmatpush1.msra.mxu0 0.0
    %378 = vmatprep.subr.mxu0 0.0
    %379 = vmatpush1.msra.mxu0 0.0
    %380 = vmatprep.subr.mxu0 0.0
    %381 = vmatpush1.msra.mxu0 0.0
    %382 = vmatprep.subr.mxu0 0.0
    %383 = vmatpush1.msra.mxu0 0.0
    %384 = vmatprep.subr.mxu0 0.0
    %385 = vmatpush1.msra.mxu0 0.0
    %386 = vmatprep.subr.mxu0 0.0
    %387 = vmatpush1.msra.mxu0 0.0
    %388 = vmatprep.subr.mxu0 0.0
    %389 = vmatpush1.msra.mxu0 0.0
    %390 = vmatprep.subr.mxu0 0.0
    %391 = vmatpush1.msra.mxu0 0.0
    %392 = vmatprep.subr.mxu0 0.0
    %393 = vmatpush1.msra.mxu0 0.0
    %394 = vmatprep.subr.mxu0 0.0
    %395 = vmatpush1.msra.mxu0 0.0
    %396 = vmatprep.mubr.f32.mxu0 0.0
    %397 = vmatmul.mubr.f32.gmra.mrb[0].mxu0 %v330
    %v398 = vpop.f32.mrb[0].mxu0
    %v399 = vadd.f32 %v326, %v398
    %v400 = vpop.f32.mrb[0].mxu0
    %v401 = vadd.f32 %v326, %v400
    %402 = vdwg.mxu0
    %403 = vst [vmem:[#allocation2] sm:$0xff] %v399
    %404 = vst [vmem:[#allocation2 + $0x8] sm:$0xff] %v401
    // Predicated region
    $region30: #{tpu_custom_call.1} parent=1 // pred_check
      _
    $region31: #{tpu_custom_call.1} parent=1 // pred_check_branch
      %406 = sbr.rel (0) target = $region33
    $region32: #{tpu_custom_call.1} parent=1 // pred_region
      %s408 = ssub.s32 256, 256
      %409 = vsyncadd [#allocation3], %s408
      %s411 = sshll.u32 [#allocation2], 4
      %s412 = int_to_ptr.vmem [resolvable:$true] %s411
      %414 = dma.vmem_to_hbm [thread:$0]  %s412, 256, %s7, [#allocation3]
    $region33: #{tpu_custom_call.1} parent=1 // pred_fallthru
      _
    // Predicated region
    $region34: #{tpu_custom_call.1} parent=1 // pred_check
      _
    $region35: #{tpu_custom_call.1} parent=1 // pred_check_branch
      %416 = sbr.rel (0) target = $region37
    $region36: #{tpu_custom_call.1} parent=1 // pred_region
      %417 = dma.done [#allocation3], 256
    $region37: #{tpu_custom_call.1} parent=1 // pred_fallthru
      _
    %418 = vsyncpa [#allocation3], 1

</llo_original>
